<compile_context>
chip_gen: v5e
topology: v5e:2x2
jax: 0.10.0
libtpu: 0.0.40
codegen_flags: <defaults>
</compile_context>

<pallas_src>
import functools

import jax
import jax.numpy as jnp
from jax.experimental import pallas as pl
from jax.experimental.pallas import tpu as pltpu


def _round_up(v, m):
    return ((v + m - 1) // m) * m


def _sublayer_connection_kernel(x_ref, a2_ref, b2_ref, w_ref, bias_ref, o_ref,
                                *, eps, d):
    """Fused LayerNorm -> linear sublayer -> (eval) dropout -> residual add.

    x_ref:    (tm, D) row tile of the input
    a2_ref:   (1, D)  LayerNorm scale  (resident across the grid)
    b2_ref:   (1, D)  LayerNorm shift  (resident)
    w_ref:    (D, D)  sublayer weight  (resident)
    bias_ref: (1, D)  sublayer bias    (resident)
    o_ref:    (tm, D) output row tile
    """
    x = x_ref[...].astype(jnp.float32)                         # (tm, D)

    # ---- LayerNorm exactly as the PyTorch module:
    #      a_2 * (x - mean) / (std + eps) + b_2, with unbiased std (N-1).
    mean = jnp.mean(x, axis=-1, keepdims=True)
    xc = x - mean
    var = jnp.sum(xc * xc, axis=-1, keepdims=True) * (1.0 / (d - 1))
    std = jnp.sqrt(var)
    normed = a2_ref[...] * (xc / (std + eps)) + b2_ref[...]     # (tm, D)

    # ---- concrete position-wise (row-local) sublayer: Linear(D, D) on the MXU.
    sub = jnp.dot(normed, w_ref[...],
                  preferred_element_type=jnp.float32) + bias_ref[...]

    # ---- dropout in eval mode is identity; apply the residual connection.
    o_ref[...] = (x + sub).astype(o_ref.dtype)


def sublayer_connection_forward(x, a2, b2, w, bias, *, eps=1e-6, tm_max=256):
    """x: (B, S, D).  a2/b2: (D,) LayerNorm params.  w: (D, D), bias: (D,)
    parameters of the example linear sublayer.  Returns (B, S, D)."""
    B, S, D = x.shape
    M = B * S
    x2 = x.reshape(M, D)

    # Pick the row tile for the hardware, not for divisibility: pad rows up.
    tm = min(tm_max, _round_up(M, 8))
    M_pad = _round_up(M, tm)
    if M_pad != M:
        x2 = jnp.pad(x2, ((0, M_pad - M), (0, 0)))

    a2_2 = a2.reshape(1, D)
    b2_2 = b2.reshape(1, D)
    bias2 = bias.reshape(1, D)

    grid = (M_pad // tm,)

    cost = pl.CostEstimate(
        flops=2 * M_pad * D * D + 10 * M_pad * D,
        transcendentals=0,
        bytes_accessed=4 * (2 * M_pad * D + D * D + 3 * D),
    )

    kernel = functools.partial(_sublayer_connection_kernel, eps=eps, d=D)

    out = pl.pallas_call(
        kernel,
        out_shape=jax.ShapeDtypeStruct((M_pad, D), x.dtype),
        grid_spec=pltpu.PrefetchScalarGridSpec(
            num_scalar_prefetch=0,
            grid=grid,
            in_specs=[
                pl.BlockSpec((tm, D), lambda i: (i, 0)),   # row tile of x
                pl.BlockSpec((1, D), lambda i: (0, 0)),    # a_2 (resident)
                pl.BlockSpec((1, D), lambda i: (0, 0)),    # b_2 (resident)
                pl.BlockSpec((D, D), lambda i: (0, 0)),    # sublayer W (resident)
                pl.BlockSpec((1, D), lambda i: (0, 0)),    # sublayer bias (resident)
            ],
            out_specs=pl.BlockSpec((tm, D), lambda i: (i, 0)),
        ),
        compiler_params=pltpu.CompilerParams(
            dimension_semantics=("parallel",),
            vmem_limit_bytes=48 * 1024 * 1024,
        ),
        cost_estimate=cost,
    )(x2, a2_2, b2_2, w, bias2)

    return out[:M].reshape(B, S, D)


def reference_forward(x, a2, b2, w, bias, eps=1e-6):
    """Pure-JAX replica of SublayerConnection (eval mode) with the same
    PyTorch LayerNorm semantics (unbiased std, std + eps) and Linear sublayer."""
    mean = jnp.mean(x, axis=-1, keepdims=True)
    var = jnp.sum((x - mean) ** 2, axis=-1, keepdims=True) / (x.shape[-1] - 1)
    std = jnp.sqrt(var)
    normed = a2 * (x - mean) / (std + eps) + b2
    sub = jnp.einsum("bsd,de->bse", normed, w) + bias
    return x + sub  # dropout is identity in eval mode


if __name__ == "__main__":
    # Small shapes consistent with the module: batch=2, seq=8, d_model=32.
    B, S, D = 2, 8, 32

    key = jax.random.PRNGKey(0)
    kx, kw, kb, ka, kg = jax.random.split(key, 5)

    x = jax.random.normal(kx, (B, S, D), dtype=jnp.float32)
    # LayerNorm params (perturbed from the ones/zeros init so they are exercised).
    a2 = 1.0 + 0.1 * jax.random.normal(ka, (D,), dtype=jnp.float32)
    b2 = 0.1 * jax.random.normal(kg, (D,), dtype=jnp.float32)
    # Deterministic "Linear(d_model, d_model)" sublayer parameters.
    w = jax.random.normal(kw, (D, D), dtype=jnp.float32) * (1.0 / jnp.sqrt(D))
    bias = jax.random.normal(kb, (D,), dtype=jnp.float32) * 0.01

    y = sublayer_connection_forward(x, a2, b2, w, bias)
    y = jax.block_until_ready(y)

    y_ref = reference_forward(x, a2, b2, w, bias)
    assert y.shape == (B, S, D)
    assert jnp.allclose(y, y_ref, atol=1e-4, rtol=1e-4), "mismatch vs reference"

    print("KERNEL_OK")
</pallas_src>

<mosaic_0001>
module attributes {stable_mosaic.version = 11 : i64} {
  func.func @_sublayer_connection_kernel(%arg0: i32, %arg1: memref<16x32xf32, #tpu.memory_space<vmem>>, %arg2: memref<1x32xf32, #tpu.memory_space<vmem>>, %arg3: memref<1x32xf32, #tpu.memory_space<vmem>>, %arg4: memref<32x32xf32, #tpu.memory_space<vmem>>, %arg5: memref<1x32xf32, #tpu.memory_space<vmem>>, %arg6: memref<16x32xf32, #tpu.memory_space<vmem>>) attributes {dimension_semantics = [#tpu.dimension_semantics<parallel>], iteration_bounds = array<i64: 1>, scalar_prefetch = 0 : i64, scratch_operands = 0 : i64, tpu.core_type = #tpu.core_type<tc>, window_params = [{transform_indices = @transform_0, window_bounds = array<i64: 16, 32>}, {pipeline_mode = #tpu.pipeline_mode<synchronous>, transform_indices = @transform_1, window_bounds = array<i64: 1, 32>}, {pipeline_mode = #tpu.pipeline_mode<synchronous>, transform_indices = @transform_2, window_bounds = array<i64: 1, 32>}, {pipeline_mode = #tpu.pipeline_mode<synchronous>, transform_indices = @transform_3, window_bounds = array<i64: 32, 32>}, {pipeline_mode = #tpu.pipeline_mode<synchronous>, transform_indices = @transform_4, window_bounds = array<i64: 1, 32>}, {transform_indices = @transform_5, window_bounds = array<i64: 16, 32>}]} {
    %c0 = arith.constant 0 : index
    %c0_0 = arith.constant 0 : index
    %0 = vector.load %arg1[%c0, %c0_0] : memref<16x32xf32, #tpu.memory_space<vmem>>, vector<16x32xf32>
    %cst = arith.constant dense<0.000000e+00> : vector<16xf32>
    %1 = vector.multi_reduction <add>, %0, %cst [1] : vector<16x32xf32> to vector<16xf32>
    %2 = vector.shape_cast %1 : vector<16xf32> to vector<16x1xf32>
    %cst_1 = arith.constant 3.200000e+01 : f32
    %3 = vector.broadcast %cst_1 : f32 to vector<16x1xf32>
    %4 = arith.divf %2, %3 : vector<16x1xf32>
    %5 = vector.broadcast %4 : vector<16x1xf32> to vector<16x32xf32>
    %6 = arith.subf %0, %5 : vector<16x32xf32>
    %7 = arith.mulf %6, %6 : vector<16x32xf32>
    %cst_2 = arith.constant dense<0.000000e+00> : vector<16xf32>
    %8 = vector.multi_reduction <add>, %7, %cst_2 [1] : vector<16x32xf32> to vector<16xf32>
    %9 = vector.shape_cast %8 : vector<16xf32> to vector<16x1xf32>
    %cst_3 = arith.constant 0.0322580636 : f32
    %10 = vector.broadcast %cst_3 : f32 to vector<16x1xf32>
    %11 = arith.mulf %9, %10 : vector<16x1xf32>
    %12 = math.sqrt %11 : vector<16x1xf32>
    %c0_4 = arith.constant 0 : index
    %c0_5 = arith.constant 0 : index
    %13 = vector.load %arg2[%c0_4, %c0_5] : memref<1x32xf32, #tpu.memory_space<vmem>>, vector<1x32xf32>
    %cst_6 = arith.constant 9.99999997E-7 : f32
    %14 = vector.broadcast %cst_6 : f32 to vector<16x1xf32>
    %15 = arith.addf %12, %14 : vector<16x1xf32>
    %16 = vector.broadcast %15 : vector<16x1xf32> to vector<16x32xf32>
    %17 = arith.divf %6, %16 : vector<16x32xf32>
    %18 = vector.broadcast %13 : vector<1x32xf32> to vector<16x32xf32>
    %19 = arith.mulf %18, %17 : vector<16x32xf32>
    %c0_7 = arith.constant 0 : index
    %c0_8 = arith.constant 0 : index
    %20 = vector.load %arg3[%c0_7, %c0_8] : memref<1x32xf32, #tpu.memory_space<vmem>>, vector<1x32xf32>
    %21 = vector.broadcast %20 : vector<1x32xf32> to vector<16x32xf32>
    %22 = arith.addf %19, %21 : vector<16x32xf32>
    %c0_9 = arith.constant 0 : index
    %c0_10 = arith.constant 0 : index
    %23 = vector.load %arg4[%c0_9, %c0_10] : memref<32x32xf32, #tpu.memory_space<vmem>>, vector<32x32xf32>
    %cst_11 = arith.constant dense<0.000000e+00> : vector<16x32xf32>
    %24 = tpu.matmul %22, %23, %cst_11 {dimension_numbers = #tpu.dot_dimension_numbers<[1], [0], [0], [1], [0, 0, 1, 1], [], []>} : vector<16x32xf32>, vector<32x32xf32>, vector<16x32xf32> -> vector<16x32xf32>
    %c0_12 = arith.constant 0 : index
    %c0_13 = arith.constant 0 : index
    %25 = vector.load %arg5[%c0_12, %c0_13] : memref<1x32xf32, #tpu.memory_space<vmem>>, vector<1x32xf32>
    %26 = vector.broadcast %25 : vector<1x32xf32> to vector<16x32xf32>
    %27 = arith.addf %24, %26 : vector<16x32xf32>
    %28 = arith.addf %0, %27 : vector<16x32xf32>
    %c0_14 = arith.constant 0 : index
    %c0_15 = arith.constant 0 : index
    %29 = vector.load %arg6[%c0_14, %c0_15] : memref<16x32xf32, #tpu.memory_space<vmem>>, vector<16x32xf32>
    tpu.vector_store %arg6[%c0_14, %c0_15], %28 {strides = array<i32>} : memref<16x32xf32, #tpu.memory_space<vmem>>, vector<16x32xf32>,
    return
  }
  func.func @transform_0(%arg0: i32) -> (i32, i32) {
    %c0_i32 = arith.constant 0 : i32
    %c0_i32_0 = arith.constant 0 : i32
    return %arg0, %c0_i32 : i32, i32
  }
  func.func @transform_1(%arg0: i32) -> (i32, i32) {
    %c0_i32 = arith.constant 0 : i32
    %c0_i32_0 = arith.constant 0 : i32
    %c0_i32_1 = arith.constant 0 : i32
    return %c0_i32, %c0_i32_0 : i32, i32
  }
  func.func @transform_2(%arg0: i32) -> (i32, i32) {
    %c0_i32 = arith.constant 0 : i32
    %c0_i32_0 = arith.constant 0 : i32
    %c0_i32_1 = arith.constant 0 : i32
    return %c0_i32, %c0_i32_0 : i32, i32
  }
  func.func @transform_3(%arg0: i32) -> (i32, i32) {
    %c0_i32 = arith.constant 0 : i32
    %c0_i32_0 = arith.constant 0 : i32
    %c0_i32_1 = arith.constant 0 : i32
    return %c0_i32, %c0_i32_0 : i32, i32
  }
  func.func @transform_4(%arg0: i32) -> (i32, i32) {
    %c0_i32 = arith.constant 0 : i32
    %c0_i32_0 = arith.constant 0 : i32
    %c0_i32_1 = arith.constant 0 : i32
    return %c0_i32, %c0_i32_0 : i32, i32
  }
  func.func @transform_5(%arg0: i32) -> (i32, i32) {
    %c0_i32 = arith.constant 0 : i32
    %c0_i32_0 = arith.constant 0 : i32
    return %arg0, %c0_i32 : i32, i32
  }
}

</mosaic_0001>

<llo_original>
// kernel: tpu_custom_call.1
$region0: #{tpu_custom_call.1}
  #allocation0 [shape = 'u32[]', space=smem, size = 0x4, offset = 0x4, fixed_abs, tag = 'smem constant byte address 0x4 - core index']
  #allocation1 [shape = 'u32[72,128]{1,0:T(1,128)}', space=vmem, size = 0x9000, scoped, tag = 'internal scratch']
  %s0 = inlined_call_operand.hbm [shape: f32[16,32], index: 0, kind: input, shape index: {}]
  %s1 = inlined_call_operand.hbm [shape: f32[1,32], index: 1, kind: input, shape index: {}]
  %s2 = inlined_call_operand.vmem [shape: f32[1,32], index: 2, kind: input, shape index: {}]
  %s3 = inlined_call_operand.hbm [shape: f32[32,32], index: 3, kind: input, shape index: {}]
  %s4 = inlined_call_operand.vmem [shape: f32[1,32], index: 4, kind: input, shape index: {}]
  %s5 = inlined_call_operand.hbm [shape: f32[16,32], index: 5, kind: output, shape index: {}]
  %s6 = sld [smem:[#allocation0]]
  $region42: #{tpu_custom_call.1} parent=0
    _
  %s8 = ssub.s32 1, %s6
  %s9 = scalar_select 0, %s8, %s6
  $region1: #{tpu_custom_call.1} parent=0
    #allocation2 [shape = 'u8[8192]{0}', space=vmem, size = 0x2000, scoped, tag = 'input window, operand 0, single buffered']
    #allocation3 [shape = 's32[1]{0}', space=sflag, size = 0x4, scoped, tag = 'scoped memory for tpu_custom_call.1']
    #allocation4 [shape = 's32[1]{0}', space=sflag, size = 0x4, scoped, tag = 'scoped memory for tpu_custom_call.1']
    #allocation5 [shape = 'u8[512]{0}', space=vmem, size = 0x400, scoped, tag = 'input window, operand 1, single buffered']
    #allocation6 [shape = 's32[1]{0}', space=sflag, size = 0x4, scoped, tag = 'scoped memory for tpu_custom_call.1']
    #allocation7 [shape = 'u8[16384]{0}', space=vmem, size = 0x4000, scoped, tag = 'input window, operand 3, single buffered']
    #allocation8 [shape = 'u8[8192]{0}', space=vmem, size = 0x2000, scoped, tag = 'output window, operand 0, single buffered']
    %10 = vsyncpa [#allocation3], 0
    %11 = vsyncpa [#allocation6], 0
    %12 = vsyncpa [#allocation4], 0
    // Predicated region
    $region2: #{tpu_custom_call.1} parent=1 // pred_check
      _
    $region3: #{tpu_custom_call.1} parent=1 // pred_check_branch
      %14 = sbr.rel (0) target = $region5
    $region4: #{tpu_custom_call.1} parent=1 // pred_region
      %16 = vsyncadd [#allocation3], 0
      %s17 = sshll.u32 %s0, 4
      %s18 = int_to_ptr.hbm [resolvable:$true] %s17
      %s19 = sshll.u32 [#allocation2], 4
      %s20 = int_to_ptr.vmem [resolvable:$true] %s19
      %25 = dma.hbm_to_vmem [thread:$0]  %s18, 256, %s20, [#allocation3], 128, 128, 8
    $region5: #{tpu_custom_call.1} parent=1 // pred_fallthru
      _
    // Predicated region
    $region6: #{tpu_custom_call.1} parent=1 // pred_check
      _
    $region7: #{tpu_custom_call.1} parent=1 // pred_check_branch
      %27 = sbr.rel (0) target = $region9
    $region8: #{tpu_custom_call.1} parent=1 // pred_region
      %29 = vsyncadd [#allocation6], 0
      %s31 = sshll.u32 %s1, 4
      %s32 = int_to_ptr.hbm [resolvable:$true] %s31
      %s33 = sshll.u32 [#allocation5], 4
      %s34 = int_to_ptr.vmem [resolvable:$true] %s33
      %36 = dma.hbm_to_vmem [thread:$0]  %s32, 16, %s34, [#allocation6]
    $region9: #{tpu_custom_call.1} parent=1 // pred_fallthru
      _
    // Predicated region
    $region10: #{tpu_custom_call.1} parent=1 // pred_check
      _
    $region11: #{tpu_custom_call.1} parent=1 // pred_check_branch
      %38 = sbr.rel (0) target = $region13
    $region12: #{tpu_custom_call.1} parent=1 // pred_region
      _
    $region13: #{tpu_custom_call.1} parent=1 // pred_fallthru
      _
    // Predicated region
    $region14: #{tpu_custom_call.1} parent=1 // pred_check
      _
    $region15: #{tpu_custom_call.1} parent=1 // pred_check_branch
      %40 = sbr.rel (0) target = $region17
    $region16: #{tpu_custom_call.1} parent=1 // pred_region
      %42 = vsyncadd [#allocation6], 0
      %s43 = sshll.u32 %s3, 4
      %s44 = int_to_ptr.hbm [resolvable:$true] %s43
      %s45 = sshll.u32 [#allocation7], 4
      %s46 = int_to_ptr.vmem [resolvable:$true] %s45
      %51 = dma.hbm_to_vmem [thread:$0]  %s44, 512, %s46, [#allocation6], 128, 128, 8
    $region17: #{tpu_custom_call.1} parent=1 // pred_fallthru
      _
    // Predicated region
    $region18: #{tpu_custom_call.1} parent=1 // pred_check
      _
    $region19: #{tpu_custom_call.1} parent=1 // pred_check_branch
      %53 = sbr.rel (0) target = $region21
    $region20: #{tpu_custom_call.1} parent=1 // pred_region
      _
    $region21: #{tpu_custom_call.1} parent=1 // pred_fallthru
      _
    // Predicated region
    $region22: #{tpu_custom_call.1} parent=1 // pred_check
      _
    $region23: #{tpu_custom_call.1} parent=1 // pred_check_branch
      %55 = sbr.rel (0) target = $region25
    $region24: #{tpu_custom_call.1} parent=1 // pred_region
      %57 = dma.done [#allocation3], 256
    $region25: #{tpu_custom_call.1} parent=1 // pred_fallthru
      _
    // Predicated region
    $region26: #{tpu_custom_call.1} parent=1 // pred_check
      _
    $region27: #{tpu_custom_call.1} parent=1 // pred_check_branch
      %59 = sbr.rel (0) target = $region29
    $region28: #{tpu_custom_call.1} parent=1 // pred_region
      %61 = dma.done [#allocation6], 16
    $region29: #{tpu_custom_call.1} parent=1 // pred_fallthru
      _
    // Predicated region
    $region30: #{tpu_custom_call.1} parent=1 // pred_check
      _
    $region31: #{tpu_custom_call.1} parent=1 // pred_check_branch
      %63 = sbr.rel (0) target = $region33
    $region32: #{tpu_custom_call.1} parent=1 // pred_region
      %65 = dma.done [#allocation6], 512
    $region33: #{tpu_custom_call.1} parent=1 // pred_fallthru
      _
    %v66 = vld [vmem:[#allocation2] sm:$0xff]
    %v67 = vld [vmem:[#allocation2 + $0x8] sm:$0xff]
    %vm68 = vcmask 261120
    %v69 = vsel %vm68, %v66, 0.0
    %70 = vadd.xlane.f32.xlu0 %v69
    %v71 = vpop.xlane.xlu0 %70
    %v72 = vsel %vm68, %v67, 0.0
    %73 = vadd.xlane.f32.xlu0 %v72
    %v74 = vpop.xlane.xlu0 %73
    %v75 = vrcp.pop 32.0
    %v76 = vmul.f32 32.0, %v75
    %v77 = vsub.f32 1.0, %v76
    %v78 = vmul.f32 %v75, %v77
    %v79 = vadd.f32 %v75, %v78
    %vm80 = vweird.f32 %v75
    %v81 = vsel %vm80, %v75, %v79
    %v82 = vmul.f32 %v71, %v81
    %v83 = vmul.f32 %v74, %v81
    %v84 = vsub.f32 %v66, %v82
    %v85 = vsub.f32 %v67, %v83
    %v86 = vmul.f32 %v84, %v84
    %v87 = vmul.f32 %v85, %v85
    %v88 = vsel %vm68, %v86, 0.0
    %89 = vadd.xlane.f32.xlu0 %v88
    %v90 = vpop.xlane.xlu0 %89
    %v91 = vsel %vm68, %v87, 0.0
    %92 = vadd.xlane.f32.xlu0 %v91
    %v93 = vpop.xlane.xlu0 %92
    %v94 = vmul.f32 %v90, 0.032258064
    %v95 = vmul.f32 %v93, 0.032258064
    %v96 = vrsqrt.pop %v94
    %v97 = vmul.f32 %v96, %v94
    %v98 = vmul.f32 %v97, %v96
    %v99 = vmul.f32 0.5, %v98
    %v100 = vsub.f32 1.5, %v99
    %v101 = vmul.f32 %v96, %v100
    %v102 = vmul.f32 %v94, %v101
    %vm103 = vcmp.eq.f32.partialorder %v94, inf
    %v104 = vsel %vm103, %v94, %v102
    %vm105 = vcmp.eq.f32.partialorder %v94, 0.0
    %v106 = vand.u32 %v94, 2147483648
    %v107 = vsel %vm105, %v106, %v104
    %v108 = vrsqrt.pop %v95
    %v109 = vmul.f32 %v108, %v95
    %v110 = vmul.f32 %v109, %v108
    %v111 = vmul.f32 0.5, %v110
    %v112 = vsub.f32 1.5, %v111
    %v113 = vmul.f32 %v108, %v112
    %v114 = vmul.f32 %v95, %v113
    %vm115 = vcmp.eq.f32.partialorder %v95, inf
    %v116 = vsel %vm115, %v95, %v114
    %vm117 = vcmp.eq.f32.partialorder %v95, 0.0
    %v118 = vand.u32 %v95, 2147483648
    %v119 = vsel %vm117, %v118, %v116
    %v120 = vld [vmem:[#allocation5] sm:$0x1]
    %v121 = vadd.f32 %v107, 1e-06
    %v122 = vadd.f32 %v119, 1e-06
    %v123 = vrcp.pop %v121
    %v124 = vmul.f32 %v121, %v123
    %v125 = vsub.f32 1.0, %v124
    %v126 = vmul.f32 %v123, %v125
    %v127 = vadd.f32 %v123, %v126
    %vm128 = vweird.f32 %v121
    %vm129 = vweird.f32 %v123
    %vm130 = vmor %vm128, %vm129
    %v131 = vsel %vm130, %v123, %v127
    %v132 = vand.u32 2147483647, %v121
    %vm133 = vcmp.eq.f32.partialorder %v132, 8.507059e+37
    %v134 = vand.u32 %v121, 2147483648
    %v135 = vor.u32 1.1754944e-38, %v134
    %v136 = vsel %vm133, %v135, %v131
    %v137 = vmul.f32 %v84, %v136
    %v138 = vrcp.pop %v122
    %v139 = vmul.f32 %v122, %v138
    %v140 = vsub.f32 1.0, %v139
    %v141 = vmul.f32 %v138, %v140
    %v142 = vadd.f32 %v138, %v141
    %vm143 = vweird.f32 %v122
    %vm144 = vweird.f32 %v138
    %vm145 = vmor %vm143, %vm144
    %v146 = vsel %vm145, %v138, %v142
    %v147 = vand.u32 2147483647, %v122
    %vm148 = vcmp.eq.f32.partialorder %v147, 8.507059e+37
    %v149 = vand.u32 %v122, 2147483648
    %v150 = vor.u32 1.1754944e-38, %v149
    %v151 = vsel %vm148, %v150, %v146
    %v152 = vmul.f32 %v85, %v151
    %v154 = vperm.slane %v120, 0
    %v156 = vmul.f32 %v154, %v137
    %v157 = vmul.f32 %v154, %v152
    %v158 = vld [vmem:[%s2] sm:$0x1]
    %v160 = vperm.slane %v158, 0
    %v162 = vadd.f32 %v156, %v160
    %v163 = vadd.f32 %v157, %v160
    %v164 = vld [vmem:[#allocation7] sm:$0xff]
    %v165 = vld [vmem:[#allocation7 + $0x8] sm:$0xff]
    %v166 = vld [vmem:[#allocation7 + $0x10] sm:$0xff]
    %v167 = vld [vmem:[#allocation7 + $0x18] sm:$0xff]
    %v168 = vld [vmem:[%s4] sm:$0x1]
    %v170 = vperm.slane %v168, 0
    %v173 = vsel %vm68, %v162, 0
    %v176 = vsel %vm68, %v163, 0
    %178 = vmatpush.msra.mxu0 0.0
    %179 = vmatpush.msra.mxu0 0.0
    %180 = vmatpush.msra.mxu0 0.0
    %181 = vmatpush.msra.mxu0 0.0
    %182 = vmatpush.msra.mxu0 0.0
    %183 = vmatpush.msra.mxu0 0.0
    %184 = vmatpush.msra.mxu0 0.0
    %185 = vmatpush.msra.mxu0 0.0
    %186 = vmatpush.msra.mxu0 0.0
    %187 = vmatpush.msra.mxu0 0.0
    %188 = vmatpush.msra.mxu0 0.0
    %189 = vmatpush.msra.mxu0 0.0
    %190 = vmatpush.msra.mxu0 %v167
    %191 = vmatpush.msra.mxu0 %v166
    %192 = vmatpush.msra.mxu0 %v165
    %193 = vmatpush.msra.mxu0 %v164
    %194 = vmatmul.f32.gmra.mxu0 %v173
    %v195 = vpop.f32.mrf.mxu0
    %v196 = vadd.f32 %v170, %v195
    %197 = vmatmul.f32.gmra.mxu0 %v176
    %v198 = vpop.f32.mrf.mxu0
    %v199 = vadd.f32 %v170, %v198
    %200 = vdwg.mxu0
    %v201 = vadd.f32 %v66, %v196
    %v202 = vadd.f32 %v67, %v199
    %203 = vst.msk [vmem:[#allocation8] sm:$0xff] %vm68, %v201
    %204 = vst.msk [vmem:[#allocation8 + $0x8] sm:$0xff] %vm68, %v202
    // Predicated region
    $region34: #{tpu_custom_call.1} parent=1 // pred_check
      _
    $region35: #{tpu_custom_call.1} parent=1 // pred_check_branch
      %206 = sbr.rel (0) target = $region37
    $region36: #{tpu_custom_call.1} parent=1 // pred_region
      %208 = vsyncadd [#allocation4], 0
      %s209 = sshll.u32 [#allocation8], 4
      %s210 = int_to_ptr.vmem [resolvable:$true] %s209
      %s211 = sshll.u32 %s5, 4
      %s212 = int_to_ptr.hbm [resolvable:$true] %s211
      %217 = dma.vmem_to_hbm [thread:$0]  %s210, 256, %s212, [#allocation4], 128, 128, 8
    $region37: #{tpu_custom_call.1} parent=1 // pred_fallthru
      _
    // Predicated region
    $region38: #{tpu_custom_call.1} parent=1 // pred_check
      _
    $region39: #{tpu_custom_call.1} parent=1 // pred_check_branch
      %219 = sbr.rel (0) target = $region41
    $region40: #{tpu_custom_call.1} parent=1 // pred_region
      %221 = dma.done [#allocation4], 256
    $region41: #{tpu_custom_call.1} parent=1 // pred_fallthru
      _
    %222 = vsyncpa [#allocation3], 1
    %223 = vsyncpa [#allocation6], 1
    %224 = vsyncpa [#allocation4], 1

</llo_original>
